<compile_context>
chip_gen: v6e
topology: v6e:2x2x1
jax: 0.10.0
libtpu: 0.0.40
codegen_flags: <defaults>
</compile_context>

<pallas_src>
import jax
import jax.numpy as jnp
from jax.experimental import pallas as pl
from jax.experimental.pallas import tpu as pltpu


def _transition_down_kernel(scale_ref, shift_ref, wt_ref, x_ref, o_ref):
    # x_ref : (tp, 2, W, C)   tp row-pairs, {top,bottom} row, W columns, C channels (lanes)
    # o_ref : (tp, Wo, C) or (tp, Wo*C)   pooled output block
    tp, _, W, C = x_ref.shape
    Wo = W // 2

    scale = scale_ref[...]            # (1, C) folded BN scale (compute dtype)
    shift = shift_ref[...]            # (1, C) folded BN shift
    wt = wt_ref[...]                  # (C, C) conv weight, (Cin, Cout) layout

    def conv_phase(s):
        # Columns s, s+2, ... of both rows of every pooling window: sublane-strided read.
        xp = x_ref[:, :, pl.ds(s, Wo, stride=2), :]                     # (tp, 2, Wo, C)
        # BatchNorm (eval) + ReLU.
        yp = jnp.maximum(xp.astype(scale.dtype) * scale + shift, 0.0)
        # 1x1 conv == channel matmul; one long-M MXU call per phase, f32 accumulation.
        zp = jnp.dot(yp.reshape(tp * 2 * Wo, C).astype(wt.dtype), wt,
                     preferred_element_type=jnp.float32)
        zp = zp.reshape(tp, 2, Wo, C)
        return jnp.maximum(zp[:, 0], zp[:, 1])                          # pool the row pair

    # MaxPool2d(2,2) = max over the two column phases of the row-pooled conv outputs.
    o = jnp.maximum(conv_phase(0), conv_phase(1))                       # (tp, Wo, C)
    o_ref[...] = o.reshape(o_ref.shape).astype(o_ref.dtype)


def _chip_info():
    """Best-effort TPU query: (vmem_capacity_bytes, num_tensorcores, is_v5e)."""
    dev, kind = None, ""
    try:
        dev = jax.devices()[0]
        kind = (getattr(dev, "device_kind", "") or "").lower()
    except Exception:
        pass
    try:
        vmem = int(pltpu.get_tpu_info().vmem_capacity_bytes)
    except Exception:
        vmem = (64 if "v7" in kind else 128) * 1024 * 1024   # v7x: 64 MiB/TC, else 128 MiB
    num_tc = getattr(dev, "num_cores", None)
    if not isinstance(num_tc, int) or num_tc <= 0:
        num_tc = 2 if any(t in kind for t in ("v4", "v5p", "v7")) else 1
    is_v5e = ("v5e" in kind) or ("v5 lite" in kind) or ("v5lite" in kind)
    return vmem, num_tc, is_v5e


def transition_down(x, gamma, beta, running_mean, running_var, conv_w, *,
                    eps=1e-5, matmul_dtype=jnp.bfloat16, layout="NCHW"):
    if layout == "NCHW":
        N, C, H, W = x.shape
    elif layout == "NHWC":
        N, H, W, C = x.shape
    else:
        raise ValueError(f"layout must be 'NCHW' or 'NHWC', got {layout!r}")
    assert H % 2 == 0 and W % 2 == 0, "MaxPool2d(2,2) needs even H and W"
    Ho, Wo = H // 2, W // 2
    NHo = N * Ho

    vmem_cap, num_tc, is_v5e = _chip_info()

    # Single layout pass (only for NCHW callers), then a FREE reshape grouping row pairs.
    # TODO(synk): keep activations NHWC end-to-end upstream (layout="NHWC") — the NCHW
    # path pays one full-HBM transpose on the way in and one on the way out.
    x_nhwc = jnp.transpose(x, (0, 2, 3, 1)) if layout == "NCHW" else x
    xg = x_nhwc.reshape(NHo, 2, W, C)

    # Fold BatchNorm (inference) into per-channel scale/shift.
    f32 = jnp.float32
    inv_std = jax.lax.rsqrt(running_var.astype(f32) + eps)
    scale = (gamma.astype(f32) * inv_std).reshape(1, C)
    shift = (beta.astype(f32)
             - running_mean.astype(f32) * gamma.astype(f32) * inv_std).reshape(1, C)

    # bf16 activations stay bf16 through BN+ReLU on bf16-VALU chips (v6e/v7x).
    compute_dtype = jnp.bfloat16 if (x.dtype == jnp.bfloat16 and not is_v5e) else jnp.float32
    scale = scale.astype(compute_dtype)
    shift = shift.astype(compute_dtype)

    # PyTorch Conv2d weight (Cout, Cin, 1, 1) -> (Cin, Cout) so that y = x @ wt.
    wt = conv_w.reshape(C, C).T.astype(matmul_dtype)

    out_dtype = x.dtype
    # Lane-dense output: flatten (Wo, C) -> Wo*C when the natural block isn't vreg-aligned.
    flatten_out = (C % 128 != 0) or (Wo % 8 != 0)

    # ---- tile selection: largest row-pair tile inside a per-generation VMEM budget ----
    in_b = jnp.dtype(x.dtype).itemsize
    out_b = jnp.dtype(out_dtype).itemsize
    mm_b = jnp.dtype(matmul_dtype).itemsize
    cd_b = jnp.dtype(compute_dtype).itemsize
    Cp = pl.cdiv(C, 128) * 128                       # lane-padded channels
    Wp = pl.cdiv(W, 8) * 8                           # sublane-padded row width
    out_pair = (pl.cdiv(Wo * C, 128) * 128 if flatten_out
                else pl.cdiv(Wo, 8) * 8 * Cp) * out_b
    per_pair = (2 * (2 * Wp * Cp) * in_b             # double-buffered input rows (padded)
                + 2 * out_pair                       # double-buffered output rows
                + 2 * Wp * Cp * (cd_b + mm_b + 4))   # live BN / matmul-operand / f32-acc values
    resident = 2 * Cp * Cp * mm_b + 4 * Cp * 8       # conv weight + BN scale/shift
    budget = max(per_pair, int(vmem_cap * 0.40) - resident)
    tp = max(1, min(budget // per_pair, NHo))
    if num_tc >= 2 and NHo >= 2:                     # 2-TC chips: keep >=2 "parallel" steps
        tp = min(tp, pl.cdiv(NHo, 2))
    if flatten_out and tp < NHo:                     # flattened out block: sublane dim must be
        tp = NHo if NHo < 8 else max(8, (tp // 8) * 8)   # a multiple of 8 (or the full dim)
    tp = min(tp, NHo)
    grid = (pl.cdiv(NHo, tp),)                       # partial last block masked by Pallas

    if flatten_out:
        out_shape = jax.ShapeDtypeStruct((NHo, Wo * C), out_dtype)
        out_spec = pl.BlockSpec((tp, Wo * C), lambda i: (i, 0))
    else:
        out_shape = jax.ShapeDtypeStruct((NHo, Wo, C), out_dtype)
        out_spec = pl.BlockSpec((tp, Wo, C), lambda i: (i, 0, 0))

    cost = pl.CostEstimate(
        flops=2 * N * H * W * C * C,
        transcendentals=0,
        bytes_accessed=int(N * H * W * C * in_b + NHo * Wo * C * out_b
                           + C * C * mm_b + 4 * C * 4),
    )

    out = pl.pallas_call(
        _transition_down_kernel,
        out_shape=out_shape,
        grid_spec=pltpu.PrefetchScalarGridSpec(
            num_scalar_prefetch=0,
            grid=grid,
            in_specs=[
                pl.BlockSpec((1, C), lambda i: (0, 0)),               # BN scale
                pl.BlockSpec((1, C), lambda i: (0, 0)),               # BN shift
                pl.BlockSpec((C, C), lambda i: (0, 0)),               # conv weight
                pl.BlockSpec((tp, 2, W, C), lambda i: (i, 0, 0, 0)),  # input row-pairs
            ],
            out_specs=out_spec,
        ),
        compiler_params=pltpu.CompilerParams(
            dimension_semantics=("parallel",),
            vmem_limit_bytes=min(int(vmem_cap * 0.85), 127 * 1024 * 1024),
        ),
        cost_estimate=cost,
    )(scale, shift, wt, xg)

    out = out.reshape(N, Ho, Wo, C)
    return jnp.transpose(out, (0, 3, 1, 2)) if layout == "NCHW" else out


def _reference(x, gamma, beta, mean, var, w, eps=1e-5):
    # Pure-JAX reference of the PyTorch forward (eval mode).
    N, C, H, W = x.shape
    inv = jax.lax.rsqrt(var + eps)
    y = (x - mean[None, :, None, None]) * inv[None, :, None, None]
    y = gamma[None, :, None, None] * y + beta[None, :, None, None]
    y = jnp.maximum(y, 0.0)
    y = jnp.einsum('oc,nchw->nohw', w.reshape(C, C), y)
    return y.reshape(N, C, H // 2, 2, W // 2, 2).max(axis=(3, 5))


if __name__ == "__main__":
    key = jax.random.PRNGKey(0)
    k_x, k_g, k_b, k_m, k_v, k_w = jax.random.split(key, 6)

    N, C, H, W = 2, 8, 16, 16
    x = jax.random.normal(k_x, (N, C, H, W), dtype=jnp.float32)

    # Deterministic synthetic parameters (BatchNorm2d(C) + Conv2d(C, C, 1, bias=False)).
    gamma = 1.0 + 0.1 * jax.random.normal(k_g, (C,), dtype=jnp.float32)
    beta = 0.1 * jax.random.normal(k_b, (C,), dtype=jnp.float32)
    running_mean = 0.1 * jax.random.normal(k_m, (C,), dtype=jnp.float32)
    running_var = jnp.abs(jax.random.normal(k_v, (C,), dtype=jnp.float32)) + 0.5
    conv_w = jax.random.normal(k_w, (C, C, 1, 1), dtype=jnp.float32) / jnp.sqrt(C)

    ref = _reference(x, gamma, beta, running_mean, running_var, conv_w)

    # f32-matmul path: validates the fused kernel logic to tight tolerance.
    out_f32 = jax.block_until_ready(
        transition_down(x, gamma, beta, running_mean, running_var, conv_w,
                        matmul_dtype=jnp.float32))
    assert out_f32.shape == (N, C, H // 2, W // 2), out_f32.shape
    assert jnp.allclose(out_f32, ref, atol=1e-4, rtol=1e-4), \
        float(jnp.max(jnp.abs(out_f32 - ref)))

    # Default bf16-operand / f32-accumulate path (MXU-native on v6e/v7x).
    out_bf16 = jax.block_until_ready(
        transition_down(x, gamma, beta, running_mean, running_var, conv_w))
    assert out_bf16.shape == (N, C, H // 2, W // 2), out_bf16.shape
    assert jnp.allclose(out_bf16, ref, atol=5e-2, rtol=5e-2), \
        float(jnp.max(jnp.abs(out_bf16 - ref)))

    # NHWC-in / NHWC-out path (no wrapper transposes); must match the NCHW path.
    out_nhwc = jax.block_until_ready(
        transition_down(jnp.transpose(x, (0, 2, 3, 1)), gamma, beta,
                        running_mean, running_var, conv_w, layout="NHWC"))
    assert out_nhwc.shape == (N, H // 2, W // 2, C), out_nhwc.shape
    assert jnp.allclose(jnp.transpose(out_nhwc, (0, 3, 1, 2)), out_bf16,
                        atol=1e-6, rtol=1e-6)

    print("KERNEL_OK")
</pallas_src>

<mosaic_0001>
module attributes {stable_mosaic.version = 11 : i64} {
  func.func @_transition_down_kernel(%arg0: i32, %arg1: memref<1x8xf32, #tpu.memory_space<vmem>>, %arg2: memref<1x8xf32, #tpu.memory_space<vmem>>, %arg3: memref<8x8xf32, #tpu.memory_space<vmem>>, %arg4: memref<16x2x16x8xf32, #tpu.memory_space<vmem>>, %arg5: memref<16x64xf32, #tpu.memory_space<vmem>>) attributes {dimension_semantics = [#tpu.dimension_semantics<parallel>], iteration_bounds = array<i64: 1>, scalar_prefetch = 0 : i64, scratch_operands = 0 : i64, tpu.core_type = #tpu.core_type<tc>, window_params = [{pipeline_mode = #tpu.pipeline_mode<synchronous>, transform_indices = @transform_0, window_bounds = array<i64: 1, 8>}, {pipeline_mode = #tpu.pipeline_mode<synchronous>, transform_indices = @transform_1, window_bounds = array<i64: 1, 8>}, {pipeline_mode = #tpu.pipeline_mode<synchronous>, transform_indices = @transform_2, window_bounds = array<i64: 8, 8>}, {transform_indices = @transform_3, window_bounds = array<i64: 16, 2, 16, 8>}, {transform_indices = @transform_4, window_bounds = array<i64: 16, 64>}]} {
    %c0 = arith.constant 0 : index
    %c0_0 = arith.constant 0 : index
    %0 = vector.load %arg1[%c0, %c0_0] : memref<1x8xf32, #tpu.memory_space<vmem>>, vector<1x8xf32>
    %c0_1 = arith.constant 0 : index
    %c0_2 = arith.constant 0 : index
    %1 = vector.load %arg2[%c0_1, %c0_2] : memref<1x8xf32, #tpu.memory_space<vmem>>, vector<1x8xf32>
    %c0_3 = arith.constant 0 : index
    %c0_4 = arith.constant 0 : index
    %2 = vector.load %arg3[%c0_3, %c0_4] : memref<8x8xf32, #tpu.memory_space<vmem>>, vector<8x8xf32>
    %c0_5 = arith.constant 0 : index
    %c0_6 = arith.constant 0 : index
    %c0_7 = arith.constant 0 : index
    %c0_8 = arith.constant 0 : index
    %3 = tpu.strided_load %arg4[%c0_5, %c0_6, %c0_7, %c0_8] {strides = array<i32: 1, 1, 2, 1>} : memref<16x2x16x8xf32, #tpu.memory_space<vmem>>, vector<16x2x8x8xf32>
    %4 = vector.shape_cast %0 : vector<1x8xf32> to vector<1x1x1x8xf32>
    %5 = vector.broadcast %4 : vector<1x1x1x8xf32> to vector<16x2x8x8xf32>
    %6 = arith.mulf %3, %5 : vector<16x2x8x8xf32>
    %7 = vector.shape_cast %1 : vector<1x8xf32> to vector<1x1x1x8xf32>
    %8 = vector.broadcast %7 : vector<1x1x1x8xf32> to vector<16x2x8x8xf32>
    %9 = arith.addf %6, %8 : vector<16x2x8x8xf32>
    %cst = arith.constant 0.000000e+00 : f32
    %10 = vector.broadcast %cst : f32 to vector<16x2x8x8xf32>
    %11 = arith.maximumf %9, %10 : vector<16x2x8x8xf32>
    %12 = vector.shape_cast %11 : vector<16x2x8x8xf32> to vector<256x8xf32>
    %cst_9 = arith.constant dense<0.000000e+00> : vector<256x8xf32>
    %13 = tpu.matmul %12, %2, %cst_9 {dimension_numbers = #tpu.dot_dimension_numbers<[1], [0], [0], [1], [0, 0, 1, 1], [], []>} : vector<256x8xf32>, vector<8x8xf32>, vector<256x8xf32> -> vector<256x8xf32>
    %14 = vector.shape_cast %13 : vector<256x8xf32> to vector<16x2x8x8xf32>
    %15 = vector.extract_strided_slice %14 {offsets = [0, 0, 0, 0], sizes = [16, 1, 8, 8], strides = [1, 1, 1, 1]} : vector<16x2x8x8xf32> to vector<16x1x8x8xf32>
    %16 = vector.shape_cast %15 : vector<16x1x8x8xf32> to vector<16x8x8xf32>
    %17 = vector.extract_strided_slice %14 {offsets = [0, 1, 0, 0], sizes = [16, 1, 8, 8], strides = [1, 1, 1, 1]} : vector<16x2x8x8xf32> to vector<16x1x8x8xf32>
    %18 = vector.shape_cast %17 : vector<16x1x8x8xf32> to vector<16x8x8xf32>
    %19 = arith.maximumf %16, %18 : vector<16x8x8xf32>
    %c0_10 = arith.constant 0 : index
    %c0_11 = arith.constant 0 : index
    %c1 = arith.constant 1 : index
    %c0_12 = arith.constant 0 : index
    %20 = tpu.strided_load %arg4[%c0_10, %c0_11, %c1, %c0_12] {strides = array<i32: 1, 1, 2, 1>} : memref<16x2x16x8xf32, #tpu.memory_space<vmem>>, vector<16x2x8x8xf32>
    %21 = vector.shape_cast %0 : vector<1x8xf32> to vector<1x1x1x8xf32>
    %22 = vector.broadcast %21 : vector<1x1x1x8xf32> to vector<16x2x8x8xf32>
    %23 = arith.mulf %20, %22 : vector<16x2x8x8xf32>
    %24 = vector.shape_cast %1 : vector<1x8xf32> to vector<1x1x1x8xf32>
    %25 = vector.broadcast %24 : vector<1x1x1x8xf32> to vector<16x2x8x8xf32>
    %26 = arith.addf %23, %25 : vector<16x2x8x8xf32>
    %cst_13 = arith.constant 0.000000e+00 : f32
    %27 = vector.broadcast %cst_13 : f32 to vector<16x2x8x8xf32>
    %28 = arith.maximumf %26, %27 : vector<16x2x8x8xf32>
    %29 = vector.shape_cast %28 : vector<16x2x8x8xf32> to vector<256x8xf32>
    %cst_14 = arith.constant dense<0.000000e+00> : vector<256x8xf32>
    %30 = tpu.matmul %29, %2, %cst_14 {dimension_numbers = #tpu.dot_dimension_numbers<[1], [0], [0], [1], [0, 0, 1, 1], [], []>} : vector<256x8xf32>, vector<8x8xf32>, vector<256x8xf32> -> vector<256x8xf32>
    %31 = vector.shape_cast %30 : vector<256x8xf32> to vector<16x2x8x8xf32>
    %32 = vector.extract_strided_slice %31 {offsets = [0, 0, 0, 0], sizes = [16, 1, 8, 8], strides = [1, 1, 1, 1]} : vector<16x2x8x8xf32> to vector<16x1x8x8xf32>
    %33 = vector.shape_cast %32 : vector<16x1x8x8xf32> to vector<16x8x8xf32>
    %34 = vector.extract_strided_slice %31 {offsets = [0, 1, 0, 0], sizes = [16, 1, 8, 8], strides = [1, 1, 1, 1]} : vector<16x2x8x8xf32> to vector<16x1x8x8xf32>
    %35 = vector.shape_cast %34 : vector<16x1x8x8xf32> to vector<16x8x8xf32>
    %36 = arith.maximumf %33, %35 : vector<16x8x8xf32>
    %37 = arith.maximumf %19, %36 : vector<16x8x8xf32>
    %38 = vector.shape_cast %37 : vector<16x8x8xf32> to vector<16x64xf32>
    %c0_15 = arith.constant 0 : index
    %c0_16 = arith.constant 0 : index
    %39 = vector.load %arg5[%c0_15, %c0_16] : memref<16x64xf32, #tpu.memory_space<vmem>>, vector<16x64xf32>
    tpu.vector_store %arg5[%c0_15, %c0_16], %38 {strides = array<i32>} : memref<16x64xf32, #tpu.memory_space<vmem>>, vector<16x64xf32>,
    return
  }
  func.func @transform_0(%arg0: i32) -> (i32, i32) {
    %c0_i32 = arith.constant 0 : i32
    %c0_i32_0 = arith.constant 0 : i32
    %c0_i32_1 = arith.constant 0 : i32
    return %c0_i32, %c0_i32_0 : i32, i32
  }
  func.func @transform_1(%arg0: i32) -> (i32, i32) {
    %c0_i32 = arith.constant 0 : i32
    %c0_i32_0 = arith.constant 0 : i32
    %c0_i32_1 = arith.constant 0 : i32
    return %c0_i32, %c0_i32_0 : i32, i32
  }
  func.func @transform_2(%arg0: i32) -> (i32, i32) {
    %c0_i32 = arith.constant 0 : i32
    %c0_i32_0 = arith.constant 0 : i32
    %c0_i32_1 = arith.constant 0 : i32
    return %c0_i32, %c0_i32_0 : i32, i32
  }
  func.func @transform_3(%arg0: i32) -> (i32, i32, i32, i32) {
    %c0_i32 = arith.constant 0 : i32
    %c0_i32_0 = arith.constant 0 : i32
    %c0_i32_1 = arith.constant 0 : i32
    %c0_i32_2 = arith.constant 0 : i32
    return %arg0, %c0_i32, %c0_i32_0, %c0_i32_1 : i32, i32, i32, i32
  }
  func.func @transform_4(%arg0: i32) -> (i32, i32) {
    %c0_i32 = arith.constant 0 : i32
    %c0_i32_0 = arith.constant 0 : i32
    return %arg0, %c0_i32 : i32, i32
  }
}

</mosaic_0001>

<llo_original>
// kernel: tpu_custom_call.1
$region0: #{tpu_custom_call.1}
  #allocation0 [shape = 'u32[]', space=smem, size = 0x4, offset = 0x4, fixed_abs, tag = 'smem constant byte address 0x4 - core index']
  #allocation1 [shape = 'u32[144,128]{1,0:T(1,128)}', space=vmem, size = 0x12000, scoped, tag = 'internal scratch']
  %s0 = inlined_call_operand.vmem [shape: f32[1,8], index: 0, kind: input, shape index: {}]
  %s1 = inlined_call_operand.vmem [shape: f32[1,8], index: 1, kind: input, shape index: {}]
  %s2 = inlined_call_operand.vmem [shape: f32[8,8], index: 2, kind: input, shape index: {}]
  %s3 = inlined_call_operand.vmem [shape: f32[16,2,16,8], index: 3, kind: input, shape index: {}]
  %s4 = inlined_call_operand.hbm [shape: f32[16,64], index: 4, kind: output, shape index: {}]
  %s5 = sld [smem:[#allocation0]]
  $region26: #{tpu_custom_call.1} parent=0
    _
  %s7 = ssub.s32 1, %s5
  %s8 = scalar_select 0, %s7, %s5
  $region1: #{tpu_custom_call.1} parent=0
    #allocation2 [shape = 'u8[8192]{0}', space=vmem, size = 0x2000, scoped, tag = 'output window, operand 0, single buffered']
    #allocation3 [shape = 's32[1]{0}', space=sflag, size = 0x4, scoped, tag = 'scoped memory for tpu_custom_call.1']
    %9 = vsyncpa [#allocation3], 0
    // Predicated region
    $region2: #{tpu_custom_call.1} parent=1 // pred_check
      _
    $region3: #{tpu_custom_call.1} parent=1 // pred_check_branch
      %11 = sbr.rel (0) target = $region5
    $region4: #{tpu_custom_call.1} parent=1 // pred_region
      _
    $region5: #{tpu_custom_call.1} parent=1 // pred_fallthru
      _
    // Predicated region
    $region6: #{tpu_custom_call.1} parent=1 // pred_check
      _
    $region7: #{tpu_custom_call.1} parent=1 // pred_check_branch
      %13 = sbr.rel (0) target = $region9
    $region8: #{tpu_custom_call.1} parent=1 // pred_region
      _
    $region9: #{tpu_custom_call.1} parent=1 // pred_fallthru
      _
    // Predicated region
    $region10: #{tpu_custom_call.1} parent=1 // pred_check
      _
    $region11: #{tpu_custom_call.1} parent=1 // pred_check_branch
      %15 = sbr.rel (0) target = $region13
    $region12: #{tpu_custom_call.1} parent=1 // pred_region
      _
    $region13: #{tpu_custom_call.1} parent=1 // pred_fallthru
      _
    // Predicated region
    $region14: #{tpu_custom_call.1} parent=1 // pred_check
      _
    $region15: #{tpu_custom_call.1} parent=1 // pred_check_branch
      %17 = sbr.rel (0) target = $region17
    $region16: #{tpu_custom_call.1} parent=1 // pred_region
      _
    $region17: #{tpu_custom_call.1} parent=1 // pred_fallthru
      _
    %v18 = vld [vmem:[%s0] sm:$0x1]
    %v19 = vld [vmem:[%s1] sm:$0x1]
    %v20 = vld [vmem:[%s2] sm:$0xff]
    %v21 = vld [vmem:[%s3] ss:$2 sm:$0xff]
    %s22 = scalar_lea.vmem %s3, 16
    %v23 = vld [vmem:[%s22] ss:$2 sm:$0xff]
    %s24 = scalar_lea.vmem %s3, 32
    %v25 = vld [vmem:[%s24] ss:$2 sm:$0xff]
    %s26 = scalar_lea.vmem %s3, 48
    %v27 = vld [vmem:[%s26] ss:$2 sm:$0xff]
    %s28 = scalar_lea.vmem %s3, 64
    %v29 = vld [vmem:[%s28] ss:$2 sm:$0xff]
    %s30 = scalar_lea.vmem %s3, 80
    %v31 = vld [vmem:[%s30] ss:$2 sm:$0xff]
    %s32 = scalar_lea.vmem %s3, 96
    %v33 = vld [vmem:[%s32] ss:$2 sm:$0xff]
    %s34 = scalar_lea.vmem %s3, 112
    %v35 = vld [vmem:[%s34] ss:$2 sm:$0xff]
    %s36 = scalar_lea.vmem %s3, 128
    %v37 = vld [vmem:[%s36] ss:$2 sm:$0xff]
    %s38 = scalar_lea.vmem %s3, 144
    %v39 = vld [vmem:[%s38] ss:$2 sm:$0xff]
    %s40 = scalar_lea.vmem %s3, 160
    %v41 = vld [vmem:[%s40] ss:$2 sm:$0xff]
    %s42 = scalar_lea.vmem %s3, 176
    %v43 = vld [vmem:[%s42] ss:$2 sm:$0xff]
    %s44 = scalar_lea.vmem %s3, 192
    %v45 = vld [vmem:[%s44] ss:$2 sm:$0xff]
    %s46 = scalar_lea.vmem %s3, 208
    %v47 = vld [vmem:[%s46] ss:$2 sm:$0xff]
    %s48 = scalar_lea.vmem %s3, 224
    %v49 = vld [vmem:[%s48] ss:$2 sm:$0xff]
    %s50 = scalar_lea.vmem %s3, 240
    %v51 = vld [vmem:[%s50] ss:$2 sm:$0xff]
    %s52 = scalar_lea.vmem %s3, 256
    %v53 = vld [vmem:[%s52] ss:$2 sm:$0xff]
    %s54 = scalar_lea.vmem %s3, 272
    %v55 = vld [vmem:[%s54] ss:$2 sm:$0xff]
    %s56 = scalar_lea.vmem %s3, 288
    %v57 = vld [vmem:[%s56] ss:$2 sm:$0xff]
    %s58 = scalar_lea.vmem %s3, 304
    %v59 = vld [vmem:[%s58] ss:$2 sm:$0xff]
    %s60 = scalar_lea.vmem %s3, 320
    %v61 = vld [vmem:[%s60] ss:$2 sm:$0xff]
    %s62 = scalar_lea.vmem %s3, 336
    %v63 = vld [vmem:[%s62] ss:$2 sm:$0xff]
    %s64 = scalar_lea.vmem %s3, 352
    %v65 = vld [vmem:[%s64] ss:$2 sm:$0xff]
    %s66 = scalar_lea.vmem %s3, 368
    %v67 = vld [vmem:[%s66] ss:$2 sm:$0xff]
    %s68 = scalar_lea.vmem %s3, 384
    %v69 = vld [vmem:[%s68] ss:$2 sm:$0xff]
    %s70 = scalar_lea.vmem %s3, 400
    %v71 = vld [vmem:[%s70] ss:$2 sm:$0xff]
    %s72 = scalar_lea.vmem %s3, 416
    %v73 = vld [vmem:[%s72] ss:$2 sm:$0xff]
    %s74 = scalar_lea.vmem %s3, 432
    %v75 = vld [vmem:[%s74] ss:$2 sm:$0xff]
    %s76 = scalar_lea.vmem %s3, 448
    %v77 = vld [vmem:[%s76] ss:$2 sm:$0xff]
    %s78 = scalar_lea.vmem %s3, 464
    %v79 = vld [vmem:[%s78] ss:$2 sm:$0xff]
    %s80 = scalar_lea.vmem %s3, 480
    %v81 = vld [vmem:[%s80] ss:$2 sm:$0xff]
    %s82 = scalar_lea.vmem %s3, 496
    %v83 = vld [vmem:[%s82] ss:$2 sm:$0xff]
    %v85 = vlaneseq
    %v86 = vshrl.u32 %v85, 7
    %v87 = vsub.s32 0, %v86
    %v88 = vrot.slane %v18, %v87
    %v90 = vmul.f32 %v21, %v88
    %v91 = vmul.f32 %v23, %v88
    %v92 = vmul.f32 %v25, %v88
    %v93 = vmul.f32 %v27, %v88
    %v94 = vmul.f32 %v29, %v88
    %v95 = vmul.f32 %v31, %v88
    %v96 = vmul.f32 %v33, %v88
    %v97 = vmul.f32 %v35, %v88
    %v98 = vmul.f32 %v37, %v88
    %v99 = vmul.f32 %v39, %v88
    %v100 = vmul.f32 %v41, %v88
    %v101 = vmul.f32 %v43, %v88
    %v102 = vmul.f32 %v45, %v88
    %v103 = vmul.f32 %v47, %v88
    %v104 = vmul.f32 %v49, %v88
    %v105 = vmul.f32 %v51, %v88
    %v106 = vmul.f32 %v53, %v88
    %v107 = vmul.f32 %v55, %v88
    %v108 = vmul.f32 %v57, %v88
    %v109 = vmul.f32 %v59, %v88
    %v110 = vmul.f32 %v61, %v88
    %v111 = vmul.f32 %v63, %v88
    %v112 = vmul.f32 %v65, %v88
    %v113 = vmul.f32 %v67, %v88
    %v114 = vmul.f32 %v69, %v88
    %v115 = vmul.f32 %v71, %v88
    %v116 = vmul.f32 %v73, %v88
    %v117 = vmul.f32 %v75, %v88
    %v118 = vmul.f32 %v77, %v88
    %v119 = vmul.f32 %v79, %v88
    %v120 = vmul.f32 %v81, %v88
    %v121 = vmul.f32 %v83, %v88
    %v123 = vlaneseq
    %v124 = vshrl.u32 %v123, 7
    %v125 = vsub.s32 0, %v124
    %v126 = vrot.slane %v19, %v125
    %v128 = vadd.f32 %v90, %v126
    %v129 = vadd.f32 %v91, %v126
    %v130 = vadd.f32 %v92, %v126
    %v131 = vadd.f32 %v93, %v126
    %v132 = vadd.f32 %v94, %v126
    %v133 = vadd.f32 %v95, %v126
    %v134 = vadd.f32 %v96, %v126
    %v135 = vadd.f32 %v97, %v126
    %v136 = vadd.f32 %v98, %v126
    %v137 = vadd.f32 %v99, %v126
    %v138 = vadd.f32 %v100, %v126
    %v139 = vadd.f32 %v101, %v126
    %v140 = vadd.f32 %v102, %v126
    %v141 = vadd.f32 %v103, %v126
    %v142 = vadd.f32 %v104, %v126
    %v143 = vadd.f32 %v105, %v126
    %v144 = vadd.f32 %v106, %v126
    %v145 = vadd.f32 %v107, %v126
    %v146 = vadd.f32 %v108, %v126
    %v147 = vadd.f32 %v109, %v126
    %v148 = vadd.f32 %v110, %v126
    %v149 = vadd.f32 %v111, %v126
    %v150 = vadd.f32 %v112, %v126
    %v151 = vadd.f32 %v113, %v126
    %v152 = vadd.f32 %v114, %v126
    %v153 = vadd.f32 %v115, %v126
    %v154 = vadd.f32 %v116, %v126
    %v155 = vadd.f32 %v117, %v126
    %v156 = vadd.f32 %v118, %v126
    %v157 = vadd.f32 %v119, %v126
    %v158 = vadd.f32 %v120, %v126
    %v159 = vadd.f32 %v121, %v126
    %v160 = vmax.f32 %v128, 0.0
    %v161 = vmax.f32 %v129, 0.0
    %v162 = vmax.f32 %v130, 0.0
    %v163 = vmax.f32 %v131, 0.0
    %v164 = vmax.f32 %v132, 0.0
    %v165 = vmax.f32 %v133, 0.0
    %v166 = vmax.f32 %v134, 0.0
    %v167 = vmax.f32 %v135, 0.0
    %v168 = vmax.f32 %v136, 0.0
    %v169 = vmax.f32 %v137, 0.0
    %v170 = vmax.f32 %v138, 0.0
    %v171 = vmax.f32 %v139, 0.0
    %v172 = vmax.f32 %v140, 0.0
    %v173 = vmax.f32 %v141, 0.0
    %v174 = vmax.f32 %v142, 0.0
    %v175 = vmax.f32 %v143, 0.0
    %v176 = vmax.f32 %v144, 0.0
    %v177 = vmax.f32 %v145, 0.0
    %v178 = vmax.f32 %v146, 0.0
    %v179 = vmax.f32 %v147, 0.0
    %v180 = vmax.f32 %v148, 0.0
    %v181 = vmax.f32 %v149, 0.0
    %v182 = vmax.f32 %v150, 0.0
    %v183 = vmax.f32 %v151, 0.0
    %v184 = vmax.f32 %v152, 0.0
    %v185 = vmax.f32 %v153, 0.0
    %v186 = vmax.f32 %v154, 0.0
    %v187 = vmax.f32 %v155, 0.0
    %v188 = vmax.f32 %v156, 0.0
    %v189 = vmax.f32 %v157, 0.0
    %v190 = vmax.f32 %v158, 0.0
    %v191 = vmax.f32 %v159, 0.0
    %vm192 = vcmask 64512
    %v194 = vsel %vm192, %v160, 0
    %v197 = vsel %vm192, %v161, 0
    %v200 = vsel %vm192, %v162, 0
    %v203 = vsel %vm192, %v163, 0
    %v206 = vsel %vm192, %v164, 0
    %v209 = vsel %vm192, %v165, 0
    %v212 = vsel %vm192, %v166, 0
    %v215 = vsel %vm192, %v167, 0
    %v218 = vsel %vm192, %v168, 0
    %v221 = vsel %vm192, %v169, 0
    %v224 = vsel %vm192, %v170, 0
    %v227 = vsel %vm192, %v171, 0
    %v230 = vsel %vm192, %v172, 0
    %v233 = vsel %vm192, %v173, 0
    %v236 = vsel %vm192, %v174, 0
    %v239 = vsel %vm192, %v175, 0
    %v242 = vsel %vm192, %v176, 0
    %v245 = vsel %vm192, %v177, 0
    %v248 = vsel %vm192, %v178, 0
    %v251 = vsel %vm192, %v179, 0
    %v254 = vsel %vm192, %v180, 0
    %v257 = vsel %vm192, %v181, 0
    %v260 = vsel %vm192, %v182, 0
    %v263 = vsel %vm192, %v183, 0
    %v266 = vsel %vm192, %v184, 0
    %v269 = vsel %vm192, %v185, 0
    %v272 = vsel %vm192, %v186, 0
    %v275 = vsel %vm192, %v187, 0
    %v278 = vsel %vm192, %v188, 0
    %v281 = vsel %vm192, %v189, 0
    %v284 = vsel %vm192, %v190, 0
    %v287 = vsel %vm192, %v191, 0
    %289 = vmatprep.subr.mxu0 0.0
    %290 = vmatpush1.msra.mxu0 0.0
    %291 = vmatprep.subr.mxu0 0.0
    %292 = vmatpush1.msra.mxu0 0.0
    %293 = vmatprep.subr.mxu0 0.0
    %294 = vmatpush1.msra.mxu0 0.0
    %295 = vmatprep.subr.mxu0 0.0
    %296 = vmatpush1.msra.mxu0 0.0
    %297 = vmatprep.subr.mxu0 0.0
    %298 = vmatpush1.msra.mxu0 0.0
    %299 = vmatprep.subr.mxu0 0.0
    %300 = vmatpush1.msra.mxu0 0.0
    %301 = vmatprep.subr.mxu0 0.0
    %302 = vmatpush1.msra.mxu0 0.0
    %303 = vmatprep.subr.mxu0 0.0
    %304 = vmatpush1.msra.mxu0 0.0
    %305 = vmatprep.subr.mxu0 0.0
    %306 = vmatpush1.msra.mxu0 0.0
    %307 = vmatprep.subr.mxu0 0.0
    %308 = vmatpush1.msra.mxu0 0.0
    %309 = vmatprep.subr.mxu0 0.0
    %310 = vmatpush1.msra.mxu0 0.0
    %311 = vmatprep.subr.mxu0 0.0
    %312 = vmatpush1.msra.mxu0 0.0
    %313 = vmatprep.subr.mxu0 0.0
    %314 = vmatpush1.msra.mxu0 0.0
    %315 = vmatprep.subr.mxu0 0.0
    %316 = vmatpush1.msra.mxu0 0.0
    %317 = vmatprep.subr.mxu0 0.0
    %318 = vmatpush1.msra.mxu0 0.0
    %319 = vmatprep.subr.mxu0 0.0
    %320 = vmatpush1.msra.mxu0 %v20
    %321 = vmatprep.subr.mxu0 0.0
    %322 = vmatpush2.msra.mxu0 0.0
    %323 = vmatprep.subr.mxu0 0.0
    %324 = vmatpush2.msra.mxu0 0.0
    %325 = vmatprep.subr.mxu0 0.0
    %326 = vmatpush2.msra.mxu0 0.0
    %327 = vmatprep.subr.mxu0 0.0
    %328 = vmatpush2.msra.mxu0 0.0
    %329 = vmatprep.subr.mxu0 0.0
    %330 = vmatpush2.msra.mxu0 0.0
    %331 = vmatprep.subr.mxu0 0.0
    %332 = vmatpush2.msra.mxu0 0.0
    %333 = vmatprep.subr.mxu0 0.0
    %334 = vmatpush2.msra.mxu0 0.0
    %335 = vmatprep.subr.mxu0 0.0
    %336 = vmatpush2.msra.mxu0 0.0
    %337 = vmatprep.subr.mxu0 0.0
    %338 = vmatpush2.msra.mxu0 0.0
    %339 = vmatprep.subr.mxu0 0.0
    %340 = vmatpush2.msra.mxu0 0.0
    %341 = vmatprep.subr.mxu0 0.0
    %342 = vmatpush2.msra.mxu0 0.0
    %343 = vmatprep.subr.mxu0 0.0
    %344 = vmatpush2.msra.mxu0 0.0
    %345 = vmatprep.subr.mxu0 0.0
    %346 = vmatpush2.msra.mxu0 0.0
    %347 = vmatprep.subr.mxu0 0.0
    %348 = vmatpush2.msra.mxu0 0.0
    %349 = vmatprep.subr.mxu0 0.0
    %350 = vmatpush2.msra.mxu0 0.0
    %351 = vmatprep.subr.mxu0 0.0
    %352 = vmatpush2.msra.mxu0 0.0
    %353 = vmatprep.mubr.f32.mxu0 0.0
    %354 = vmatmul.mubr.f32.gmra.mxu0 %v194
    %v355 = vpop.f32.mrf.mxu0
    %v356 = vadd.f32 0.0, %v355
    %v357 = vpop.f32.mrf.mxu0
    %358 = vmatprep.mubr.f32.mxu0 0.0
    %359 = vmatmul.mubr.f32.gmra.mxu0 %v197
    %v360 = vpop.f32.mrf.mxu0
    %v361 = vadd.f32 0.0, %v360
    %v362 = vpop.f32.mrf.mxu0
    %363 = vmatprep.mubr.f32.mxu0 0.0
    %364 = vmatmul.mubr.f32.gmra.mxu0 %v200
    %v365 = vpop.f32.mrf.mxu0
    %v366 = vadd.f32 0.0, %v365
    %v367 = vpop.f32.mrf.mxu0
    %368 = vmatprep.mubr.f32.mxu0 0.0
    %369 = vmatmul.mubr.f32.gmra.mxu0 %v203
    %v370 = vpop.f32.mrf.mxu0
    %v371 = vadd.f32 0.0, %v370
    %v372 = vpop.f32.mrf.mxu0
    %373 = vmatprep.mubr.f32.mxu0 0.0
    %374 = vmatmul.mubr.f32.gmra.mxu0 %v206
    %v375 = vpop.f32.mrf.mxu0
    %v376 = vadd.f32 0.0, %v375
    %v377 = vpop.f32.mrf.mxu0
    %378 = vmatprep.mubr.f32.mxu0 0.0
    %379 = vmatmul.mubr.f32.gmra.mxu0 %v209
    %v380 = vpop.f32.mrf.mxu0
    %v381 = vadd.f32 0.0, %v380
    %v382 = vpop.f32.mrf.mxu0
    %383 = vmatprep.mubr.f32.mxu0 0.0
    %384 = vmatmul.mubr.f32.gmra.mxu0 %v212
    %v385 = vpop.f32.mrf.mxu0
    %v386 = vadd.f32 0.0, %v385
    %v387 = vpop.f32.mrf.mxu0
    %388 = vmatprep.mubr.f32.mxu0 0.0
    %389 = vmatmul.mubr.f32.gmra.mxu0 %v215
    %v390 = vpop.f32.mrf.mxu0
    %v391 = vadd.f32 0.0, %v390
    %v392 = vpop.f32.mrf.mxu0
    %393 = vmatprep.mubr.f32.mxu0 0.0
    %394 = vmatmul.mubr.f32.gmra.mxu0 %v218
    %v395 = vpop.f32.mrf.mxu0
    %v396 = vadd.f32 0.0, %v395
    %v397 = vpop.f32.mrf.mxu0
    %398 = vmatprep.mubr.f32.mxu0 0.0
    %399 = vmatmul.mubr.f32.gmra.mxu0 %v221
    %v400 = vpop.f32.mrf.mxu0
    %v401 = vadd.f32 0.0, %v400
    %v402 = vpop.f32.mrf.mxu0
    %403 = vmatprep.mubr.f32.mxu0 0.0
    %404 = vmatmul.mubr.f32.gmra.mxu0 %v224
    %v405 = vpop.f32.mrf.mxu0
    %v406 = vadd.f32 0.0, %v405
    %v407 = vpop.f32.mrf.mxu0
    %408 = vmatprep.mubr.f32.mxu0 0.0
    %409 = vmatmul.mubr.f32.gmra.mxu0 %v227
    %v410 = vpop.f32.mrf.mxu0
    %v411 = vadd.f32 0.0, %v410
    %v412 = vpop.f32.mrf.mxu0
    %413 = vmatprep.mubr.f32.mxu0 0.0
    %414 = vmatmul.mubr.f32.gmra.mxu0 %v230
    %v415 = vpop.f32.mrf.mxu0
    %v416 = vadd.f32 0.0, %v415
    %v417 = vpop.f32.mrf.mxu0
    %418 = vmatprep.mubr.f32.mxu0 0.0
    %419 = vmatmul.mubr.f32.gmra.mxu0 %v233
    %v420 = vpop.f32.mrf.mxu0
    %v421 = vadd.f32 0.0, %v420
    %v422 = vpop.f32.mrf.mxu0
    %423 = vmatprep.mubr.f32.mxu0 0.0
    %424 = vmatmul.mubr.f32.gmra.mxu0 %v236
    %v425 = vpop.f32.mrf.mxu0
    %v426 = vadd.f32 0.0, %v425
    %v427 = vpop.f32.mrf.mxu0
    %428 = vmatprep.mubr.f32.mxu0 0.0
    %429 = vmatmul.mubr.f32.gmra.mxu0 %v239
    %v430 = vpop.f32.mrf.mxu0
    %v431 = vadd.f32 0.0, %v430
    %v432 = vpop.f32.mrf.mxu0
    %433 = vmatprep.mubr.f32.mxu0 0.0
    %434 = vmatmul.mubr.f32.gmra.mxu0 %v242
    %v435 = vpop.f32.mrf.mxu0
    %v436 = vadd.f32 0.0, %v435
    %v437 = vpop.f32.mrf.mxu0
    %438 = vmatprep.mubr.f32.mxu0 0.0
    %439 = vmatmul.mubr.f32.gmra.mxu0 %v245
    %v440 = vpop.f32.mrf.mxu0
    %v441 = vadd.f32 0.0, %v440
    %v442 = vpop.f32.mrf.mxu0
    %443 = vmatprep.mubr.f32.mxu0 0.0
    %444 = vmatmul.mubr.f32.gmra.mxu0 %v248
    %v445 = vpop.f32.mrf.mxu0
    %v446 = vadd.f32 0.0, %v445
    %v447 = vpop.f32.mrf.mxu0
    %448 = vmatprep.mubr.f32.mxu0 0.0
    %449 = vmatmul.mubr.f32.gmra.mxu0 %v251
    %v450 = vpop.f32.mrf.mxu0
    %v451 = vadd.f32 0.0, %v450
    %v452 = vpop.f32.mrf.mxu0
    %453 = vmatprep.mubr.f32.mxu0 0.0
    %454 = vmatmul.mubr.f32.gmra.mxu0 %v254
    %v455 = vpop.f32.mrf.mxu0
    %v456 = vadd.f32 0.0, %v455
    %v457 = vpop.f32.mrf.mxu0
    %458 = vmatprep.mubr.f32.mxu0 0.0
    %459 = vmatmul.mubr.f32.gmra.mxu0 %v257
    %v460 = vpop.f32.mrf.mxu0
    %v461 = vadd.f32 0.0, %v460
    %v462 = vpop.f32.mrf.mxu0
    %463 = vmatprep.mubr.f32.mxu0 0.0
    %464 = vmatmul.mubr.f32.gmra.mxu0 %v260
    %v465 = vpop.f32.mrf.mxu0
    %v466 = vadd.f32 0.0, %v465
    %v467 = vpop.f32.mrf.mxu0
    %468 = vmatprep.mubr.f32.mxu0 0.0
    %469 = vmatmul.mubr.f32.gmra.mxu0 %v263
    %v470 = vpop.f32.mrf.mxu0
    %v471 = vadd.f32 0.0, %v470
    %v472 = vpop.f32.mrf.mxu0
    %473 = vmatprep.mubr.f32.mxu0 0.0
    %474 = vmatmul.mubr.f32.gmra.mxu0 %v266
    %v475 = vpop.f32.mrf.mxu0
    %v476 = vadd.f32 0.0, %v475
    %v477 = vpop.f32.mrf.mxu0
    %478 = vmatprep.mubr.f32.mxu0 0.0
    %479 = vmatmul.mubr.f32.gmra.mxu0 %v269
    %v480 = vpop.f32.mrf.mxu0
    %v481 = vadd.f32 0.0, %v480
    %v482 = vpop.f32.mrf.mxu0
    %483 = vmatprep.mubr.f32.mxu0 0.0
    %484 = vmatmul.mubr.f32.gmra.mxu0 %v272
    %v485 = vpop.f32.mrf.mxu0
    %v486 = vadd.f32 0.0, %v485
    %v487 = vpop.f32.mrf.mxu0
    %488 = vmatprep.mubr.f32.mxu0 0.0
    %489 = vmatmul.mubr.f32.gmra.mxu0 %v275
    %v490 = vpop.f32.mrf.mxu0
    %v491 = vadd.f32 0.0, %v490
    %v492 = vpop.f32.mrf.mxu0
    %493 = vmatprep.mubr.f32.mxu0 0.0
    %494 = vmatmul.mubr.f32.gmra.mxu0 %v278
    %v495 = vpop.f32.mrf.mxu0
    %v496 = vadd.f32 0.0, %v495
    %v497 = vpop.f32.mrf.mxu0
    %498 = vmatprep.mubr.f32.mxu0 0.0
    %499 = vmatmul.mubr.f32.gmra.mxu0 %v281
    %v500 = vpop.f32.mrf.mxu0
    %v501 = vadd.f32 0.0, %v500
    %v502 = vpop.f32.mrf.mxu0
    %503 = vmatprep.mubr.f32.mxu0 0.0
    %504 = vmatmul.mubr.f32.gmra.mxu0 %v284
    %v505 = vpop.f32.mrf.mxu0
    %v506 = vadd.f32 0.0, %v505
    %v507 = vpop.f32.mrf.mxu0
    %508 = vmatprep.mubr.f32.mxu0 0.0
    %509 = vmatmul.mubr.f32.gmra.mxu0 %v287
    %v510 = vpop.f32.mrf.mxu0
    %v511 = vadd.f32 0.0, %v510
    %v512 = vpop.f32.mrf.mxu0
    %513 = vdwg.mxu0
    %v514 = vmax.f32 %v356, %v361
    %v515 = vmax.f32 %v366, %v371
    %v516 = vmax.f32 %v376, %v381
    %v517 = vmax.f32 %v386, %v391
    %v518 = vmax.f32 %v396, %v401
    %v519 = vmax.f32 %v406, %v411
    %v520 = vmax.f32 %v416, %v421
    %v521 = vmax.f32 %v426, %v431
    %v522 = vmax.f32 %v436, %v441
    %v523 = vmax.f32 %v446, %v451
    %v524 = vmax.f32 %v456, %v461
    %v525 = vmax.f32 %v466, %v471
    %v526 = vmax.f32 %v476, %v481
    %v527 = vmax.f32 %v486, %v491
    %v528 = vmax.f32 %v496, %v501
    %v529 = vmax.f32 %v506, %v511
    %s530 = scalar_lea.vmem %s3, 1
    %v531 = vld [vmem:[%s530] ss:$2 sm:$0xff]
    %s532 = scalar_lea.vmem %s3, 17
    %v533 = vld [vmem:[%s532] ss:$2 sm:$0xff]
    %s534 = scalar_lea.vmem %s3, 33
    %v535 = vld [vmem:[%s534] ss:$2 sm:$0xff]
    %s536 = scalar_lea.vmem %s3, 49
    %v537 = vld [vmem:[%s536] ss:$2 sm:$0xff]
    %s538 = scalar_lea.vmem %s3, 65
    %v539 = vld [vmem:[%s538] ss:$2 sm:$0xff]
    %s540 = scalar_lea.vmem %s3, 81
    %v541 = vld [vmem:[%s540] ss:$2 sm:$0xff]
    %s542 = scalar_lea.vmem %s3, 97
    %v543 = vld [vmem:[%s542] ss:$2 sm:$0xff]
    %s544 = scalar_lea.vmem %s3, 113
    %v545 = vld [vmem:[%s544] ss:$2 sm:$0xff]
    %s546 = scalar_lea.vmem %s3, 129
    %v547 = vld [vmem:[%s546] ss:$2 sm:$0xff]
    %s548 = scalar_lea.vmem %s3, 145
    %v549 = vld [vmem:[%s548] ss:$2 sm:$0xff]
    %s550 = scalar_lea.vmem %s3, 161
    %v551 = vld [vmem:[%s550] ss:$2 sm:$0xff]
    %s552 = scalar_lea.vmem %s3, 177
    %v553 = vld [vmem:[%s552] ss:$2 sm:$0xff]
    %s554 = scalar_lea.vmem %s3, 193
    %v555 = vld [vmem:[%s554] ss:$2 sm:$0xff]
    %s556 = scalar_lea.vmem %s3, 209
    %v557 = vld [vmem:[%s556] ss:$2 sm:$0xff]
    %s558 = scalar_lea.vmem %s3, 225
    %v559 = vld [vmem:[%s558] ss:$2 sm:$0xff]
    %s560 = scalar_lea.vmem %s3, 241
    %v561 = vld [vmem:[%s560] ss:$2 sm:$0xff]
    %s562 = scalar_lea.vmem %s3, 257
    %v563 = vld [vmem:[%s562] ss:$2 sm:$0xff]
    %s564 = scalar_lea.vmem %s3, 273
    %v565 = vld [vmem:[%s564] ss:$2 sm:$0xff]
    %s566 = scalar_lea.vmem %s3, 289
    %v567 = vld [vmem:[%s566] ss:$2 sm:$0xff]
    %s568 = scalar_lea.vmem %s3, 305
    %v569 = vld [vmem:[%s568] ss:$2 sm:$0xff]
    %s570 = scalar_lea.vmem %s3, 321
    %v571 = vld [vmem:[%s570] ss:$2 sm:$0xff]
    %s572 = scalar_lea.vmem %s3, 337
    %v573 = vld [vmem:[%s572] ss:$2 sm:$0xff]
    %s574 = scalar_lea.vmem %s3, 353
    %v575 = vld [vmem:[%s574] ss:$2 sm:$0xff]
    %s576 = scalar_lea.vmem %s3, 369
    %v577 = vld [vmem:[%s576] ss:$2 sm:$0xff]
    %s578 = scalar_lea.vmem %s3, 385
    %v579 = vld [vmem:[%s578] ss:$2 sm:$0xff]
    %s580 = scalar_lea.vmem %s3, 401
    %v581 = vld [vmem:[%s580] ss:$2 sm:$0xff]
    %s582 = scalar_lea.vmem %s3, 417
    %v583 = vld [vmem:[%s582] ss:$2 sm:$0xff]
    %s584 = scalar_lea.vmem %s3, 433
    %v585 = vld [vmem:[%s584] ss:$2 sm:$0xff]
    %s586 = scalar_lea.vmem %s3, 449
    %v587 = vld [vmem:[%s586] ss:$2 sm:$0xff]
    %s588 = scalar_lea.vmem %s3, 465
    %v589 = vld [vmem:[%s588] ss:$2 sm:$0xff]
    %s590 = scalar_lea.vmem %s3, 481
    %v591 = vld [vmem:[%s590] ss:$2 sm:$0xff]
    %s592 = scalar_lea.vmem %s3, 497
    %v593 = vld [vmem:[%s592] ss:$2 sm:$0xff]
    %v594 = vmul.f32 %v531, %v88
    %v595 = vmul.f32 %v533, %v88
    %v596 = vmul.f32 %v535, %v88
    %v597 = vmul.f32 %v537, %v88
    %v598 = vmul.f32 %v539, %v88
    %v599 = vmul.f32 %v541, %v88
    %v600 = vmul.f32 %v543, %v88
    %v601 = vmul.f32 %v545, %v88
    %v602 = vmul.f32 %v547, %v88
    %v603 = vmul.f32 %v549, %v88
    %v604 = vmul.f32 %v551, %v88
    %v605 = vmul.f32 %v553, %v88
    %v606 = vmul.f32 %v555, %v88
    %v607 = vmul.f32 %v557, %v88
    %v608 = vmul.f32 %v559, %v88
    %v609 = vmul.f32 %v561, %v88
    %v610 = vmul.f32 %v563, %v88
    %v611 = vmul.f32 %v565, %v88
    %v612 = vmul.f32 %v567, %v88
    %v613 = vmul.f32 %v569, %v88
    %v614 = vmul.f32 %v571, %v88
    %v615 = vmul.f32 %v573, %v88
    %v616 = vmul.f32 %v575, %v88
    %v617 = vmul.f32 %v577, %v88
    %v618 = vmul.f32 %v579, %v88
    %v619 = vmul.f32 %v581, %v88
    %v620 = vmul.f32 %v583, %v88
    %v621 = vmul.f32 %v585, %v88
    %v622 = vmul.f32 %v587, %v88
    %v623 = vmul.f32 %v589, %v88
    %v624 = vmul.f32 %v591, %v88
    %v625 = vmul.f32 %v593, %v88
    %v626 = vadd.f32 %v594, %v126
    %v627 = vadd.f32 %v595, %v126
    %v628 = vadd.f32 %v596, %v126
    %v629 = vadd.f32 %v597, %v126
    %v630 = vadd.f32 %v598, %v126
    %v631 = vadd.f32 %v599, %v126
    %v632 = vadd.f32 %v600, %v126
    %v633 = vadd.f32 %v601, %v126
    %v634 = vadd.f32 %v602, %v126
    %v635 = vadd.f32 %v603, %v126
    %v636 = vadd.f32 %v604, %v126
    %v637 = vadd.f32 %v605, %v126
    %v638 = vadd.f32 %v606, %v126
    %v639 = vadd.f32 %v607, %v126
    %v640 = vadd.f32 %v608, %v126
    %v641 = vadd.f32 %v609, %v126
    %v642 = vadd.f32 %v610, %v126
    %v643 = vadd.f32 %v611, %v126
    %v644 = vadd.f32 %v612, %v126
    %v645 = vadd.f32 %v613, %v126
    %v646 = vadd.f32 %v614, %v126
    %v647 = vadd.f32 %v615, %v126
    %v648 = vadd.f32 %v616, %v126
    %v649 = vadd.f32 %v617, %v126
    %v650 = vadd.f32 %v618, %v126
    %v651 = vadd.f32 %v619, %v126
    %v652 = vadd.f32 %v620, %v126
    %v653 = vadd.f32 %v621, %v126
    %v654 = vadd.f32 %v622, %v126
    %v655 = vadd.f32 %v623, %v126
    %v656 = vadd.f32 %v624, %v126
    %v657 = vadd.f32 %v625, %v126
    %v658 = vmax.f32 %v626, 0.0
    %v659 = vmax.f32 %v627, 0.0
    %v660 = vmax.f32 %v628, 0.0
    %v661 = vmax.f32 %v629, 0.0
    %v662 = vmax.f32 %v630, 0.0
    %v663 = vmax.f32 %v631, 0.0
    %v664 = vmax.f32 %v632, 0.0
    %v665 = vmax.f32 %v633, 0.0
    %v666 = vmax.f32 %v634, 0.0
    %v667 = vmax.f32 %v635, 0.0
    %v668 = vmax.f32 %v636, 0.0
    %v669 = vmax.f32 %v637, 0.0
    %v670 = vmax.f32 %v638, 0.0
    %v671 = vmax.f32 %v639, 0.0
    %v672 = vmax.f32 %v640, 0.0
    %v673 = vmax.f32 %v641, 0.0
    %v674 = vmax.f32 %v642, 0.0
    %v675 = vmax.f32 %v643, 0.0
    %v676 = vmax.f32 %v644, 0.0
    %v677 = vmax.f32 %v645, 0.0
    %v678 = vmax.f32 %v646, 0.0
    %v679 = vmax.f32 %v647, 0.0
    %v680 = vmax.f32 %v648, 0.0
    %v681 = vmax.f32 %v649, 0.0
    %v682 = vmax.f32 %v650, 0.0
    %v683 = vmax.f32 %v651, 0.0
    %v684 = vmax.f32 %v652, 0.0
    %v685 = vmax.f32 %v653, 0.0
    %v686 = vmax.f32 %v654, 0.0
    %v687 = vmax.f32 %v655, 0.0
    %v688 = vmax.f32 %v656, 0.0
    %v689 = vmax.f32 %v657, 0.0
    %v691 = vsel %vm192, %v658, 0
    %v694 = vsel %vm192, %v659, 0
    %v697 = vsel %vm192, %v660, 0
    %v700 = vsel %vm192, %v661, 0
    %v703 = vsel %vm192, %v662, 0
    %v706 = vsel %vm192, %v663, 0
    %v709 = vsel %vm192, %v664, 0
    %v712 = vsel %vm192, %v665, 0
    %v715 = vsel %vm192, %v666, 0
    %v718 = vsel %vm192, %v667, 0
    %v721 = vsel %vm192, %v668, 0
    %v724 = vsel %vm192, %v669, 0
    %v727 = vsel %vm192, %v670, 0
    %v730 = vsel %vm192, %v671, 0
    %v733 = vsel %vm192, %v672, 0
    %v736 = vsel %vm192, %v673, 0
    %v739 = vsel %vm192, %v674, 0
    %v742 = vsel %vm192, %v675, 0
    %v745 = vsel %vm192, %v676, 0
    %v748 = vsel %vm192, %v677, 0
    %v751 = vsel %vm192, %v678, 0
    %v754 = vsel %vm192, %v679, 0
    %v757 = vsel %vm192, %v680, 0
    %v760 = vsel %vm192, %v681, 0
    %v763 = vsel %vm192, %v682, 0
    %v766 = vsel %vm192, %v683, 0
    %v769 = vsel %vm192, %v684, 0
    %v772 = vsel %vm192, %v685, 0
    %v775 = vsel %vm192, %v686, 0
    %v778 = vsel %vm192, %v687, 0
    %v781 = vsel %vm192, %v688, 0
    %v784 = vsel %vm192, %v689, 0
    %786 = vmatprep.subr.mxu0 0.0
    %787 = vmatpush1.msra.mxu0 0.0
    %788 = vmatprep.subr.mxu0 0.0
    %789 = vmatpush1.msra.mxu0 0.0
    %790 = vmatprep.subr.mxu0 0.0
    %791 = vmatpush1.msra.mxu0 0.0
    %792 = vmatprep.subr.mxu0 0.0
    %793 = vmatpush1.msra.mxu0 0.0
    %794 = vmatprep.subr.mxu0 0.0
    %795 = vmatpush1.msra.mxu0 0.0
    %796 = vmatprep.subr.mxu0 0.0
    %797 = vmatpush1.msra.mxu0 0.0
    %798 = vmatprep.subr.mxu0 0.0
    %799 = vmatpush1.msra.mxu0 0.0
    %800 = vmatprep.subr.mxu0 0.0
    %801 = vmatpush1.msra.mxu0 0.0
    %802 = vmatprep.subr.mxu0 0.0
    %803 = vmatpush1.msra.mxu0 0.0
    %804 = vmatprep.subr.mxu0 0.0
    %805 = vmatpush1.msra.mxu0 0.0
    %806 = vmatprep.subr.mxu0 0.0
    %807 = vmatpush1.msra.mxu0 0.0
    %808 = vmatprep.subr.mxu0 0.0
    %809 = vmatpush1.msra.mxu0 0.0
    %810 = vmatprep.subr.mxu0 0.0
    %811 = vmatpush1.msra.mxu0 0.0
    %812 = vmatprep.subr.mxu0 0.0
    %813 = vmatpush1.msra.mxu0 0.0
    %814 = vmatprep.subr.mxu0 0.0
    %815 = vmatpush1.msra.mxu0 0.0
    %816 = vmatprep.subr.mxu0 0.0
    %817 = vmatpush1.msra.mxu0 %v20
    %818 = vmatprep.subr.mxu0 0.0
    %819 = vmatpush2.msra.mxu0 0.0
    %820 = vmatprep.subr.mxu0 0.0
    %821 = vmatpush2.msra.mxu0 0.0
    %822 = vmatprep.subr.mxu0 0.0
    %823 = vmatpush2.msra.mxu0 0.0
    %824 = vmatprep.subr.mxu0 0.0
    %825 = vmatpush2.msra.mxu0 0.0
    %826 = vmatprep.subr.mxu0 0.0
    %827 = vmatpush2.msra.mxu0 0.0
    %828 = vmatprep.subr.mxu0 0.0
    %829 = vmatpush2.msra.mxu0 0.0
    %830 = vmatprep.subr.mxu0 0.0
    %831 = vmatpush2.msra.mxu0 0.0
    %832 = vmatprep.subr.mxu0 0.0
    %833 = vmatpush2.msra.mxu0 0.0
    %834 = vmatprep.subr.mxu0 0.0
    %835 = vmatpush2.msra.mxu0 0.0
    %836 = vmatprep.subr.mxu0 0.0
    %837 = vmatpush2.msra.mxu0 0.0
    %838 = vmatprep.subr.mxu0 0.0
    %839 = vmatpush2.msra.mxu0 0.0
    %840 = vmatprep.subr.mxu0 0.0
    %841 = vmatpush2.msra.mxu0 0.0
    %842 = vmatprep.subr.mxu0 0.0
    %843 = vmatpush2.msra.mxu0 0.0
    %844 = vmatprep.subr.mxu0 0.0
    %845 = vmatpush2.msra.mxu0 0.0
    %846 = vmatprep.subr.mxu0 0.0
    %847 = vmatpush2.msra.mxu0 0.0
    %848 = vmatprep.subr.mxu0 0.0
    %849 = vmatpush2.msra.mxu0 0.0
    %850 = vmatprep.mubr.f32.mxu0 0.0
    %851 = vmatmul.mubr.f32.gmra.mxu0 %v691
    %v852 = vpop.f32.mrf.mxu0
    %v853 = vadd.f32 0.0, %v852
    %v854 = vpop.f32.mrf.mxu0
    %855 = vmatprep.mubr.f32.mxu0 0.0
    %856 = vmatmul.mubr.f32.gmra.mxu0 %v694
    %v857 = vpop.f32.mrf.mxu0
    %v858 = vadd.f32 0.0, %v857
    %v859 = vpop.f32.mrf.mxu0
    %860 = vmatprep.mubr.f32.mxu0 0.0
    %861 = vmatmul.mubr.f32.gmra.mxu0 %v697
    %v862 = vpop.f32.mrf.mxu0
    %v863 = vadd.f32 0.0, %v862
    %v864 = vpop.f32.mrf.mxu0
    %865 = vmatprep.mubr.f32.mxu0 0.0
    %866 = vmatmul.mubr.f32.gmra.mxu0 %v700
    %v867 = vpop.f32.mrf.mxu0
    %v868 = vadd.f32 0.0, %v867
    %v869 = vpop.f32.mrf.mxu0
    %870 = vmatprep.mubr.f32.mxu0 0.0
    %871 = vmatmul.mubr.f32.gmra.mxu0 %v703
    %v872 = vpop.f32.mrf.mxu0
    %v873 = vadd.f32 0.0, %v872
    %v874 = vpop.f32.mrf.mxu0
    %875 = vmatprep.mubr.f32.mxu0 0.0
    %876 = vmatmul.mubr.f32.gmra.mxu0 %v706
    %v877 = vpop.f32.mrf.mxu0
    %v878 = vadd.f32 0.0, %v877
    %v879 = vpop.f32.mrf.mxu0
    %880 = vmatprep.mubr.f32.mxu0 0.0
    %881 = vmatmul.mubr.f32.gmra.mxu0 %v709
    %v882 = vpop.f32.mrf.mxu0
    %v883 = vadd.f32 0.0, %v882
    %v884 = vpop.f32.mrf.mxu0
    %885 = vmatprep.mubr.f32.mxu0 0.0
    %886 = vmatmul.mubr.f32.gmra.mxu0 %v712
    %v887 = vpop.f32.mrf.mxu0
    %v888 = vadd.f32 0.0, %v887
    %v889 = vpop.f32.mrf.mxu0
    %890 = vmatprep.mubr.f32.mxu0 0.0
    %891 = vmatmul.mubr.f32.gmra.mxu0 %v715
    %v892 = vpop.f32.mrf.mxu0
    %v893 = vadd.f32 0.0, %v892
    %v894 = vpop.f32.mrf.mxu0
    %895 = vmatprep.mubr.f32.mxu0 0.0
    %896 = vmatmul.mubr.f32.gmra.mxu0 %v718
    %v897 = vpop.f32.mrf.mxu0
    %v898 = vadd.f32 0.0, %v897
    %v899 = vpop.f32.mrf.mxu0
    %900 = vmatprep.mubr.f32.mxu0 0.0
    %901 = vmatmul.mubr.f32.gmra.mxu0 %v721
    %v902 = vpop.f32.mrf.mxu0
    %v903 = vadd.f32 0.0, %v902
    %v904 = vpop.f32.mrf.mxu0
    %905 = vmatprep.mubr.f32.mxu0 0.0
    %906 = vmatmul.mubr.f32.gmra.mxu0 %v724
    %v907 = vpop.f32.mrf.mxu0
    %v908 = vadd.f32 0.0, %v907
    %v909 = vpop.f32.mrf.mxu0
    %910 = vmatprep.mubr.f32.mxu0 0.0
    %911 = vmatmul.mubr.f32.gmra.mxu0 %v727
    %v912 = vpop.f32.mrf.mxu0
    %v913 = vadd.f32 0.0, %v912
    %v914 = vpop.f32.mrf.mxu0
    %915 = vmatprep.mubr.f32.mxu0 0.0
    %916 = vmatmul.mubr.f32.gmra.mxu0 %v730
    %v917 = vpop.f32.mrf.mxu0
    %v918 = vadd.f32 0.0, %v917
    %v919 = vpop.f32.mrf.mxu0
    %920 = vmatprep.mubr.f32.mxu0 0.0
    %921 = vmatmul.mubr.f32.gmra.mxu0 %v733
    %v922 = vpop.f32.mrf.mxu0
    %v923 = vadd.f32 0.0, %v922
    %v924 = vpop.f32.mrf.mxu0
    %925 = vmatprep.mubr.f32.mxu0 0.0
    %926 = vmatmul.mubr.f32.gmra.mxu0 %v736
    %v927 = vpop.f32.mrf.mxu0
    %v928 = vadd.f32 0.0, %v927
    %v929 = vpop.f32.mrf.mxu0
    %930 = vmatprep.mubr.f32.mxu0 0.0
    %931 = vmatmul.mubr.f32.gmra.mxu0 %v739
    %v932 = vpop.f32.mrf.mxu0
    %v933 = vadd.f32 0.0, %v932
    %v934 = vpop.f32.mrf.mxu0
    %935 = vmatprep.mubr.f32.mxu0 0.0
    %936 = vmatmul.mubr.f32.gmra.mxu0 %v742
    %v937 = vpop.f32.mrf.mxu0
    %v938 = vadd.f32 0.0, %v937
    %v939 = vpop.f32.mrf.mxu0
    %940 = vmatprep.mubr.f32.mxu0 0.0
    %941 = vmatmul.mubr.f32.gmra.mxu0 %v745
    %v942 = vpop.f32.mrf.mxu0
    %v943 = vadd.f32 0.0, %v942
    %v944 = vpop.f32.mrf.mxu0
    %945 = vmatprep.mubr.f32.mxu0 0.0
    %946 = vmatmul.mubr.f32.gmra.mxu0 %v748
    %v947 = vpop.f32.mrf.mxu0
    %v948 = vadd.f32 0.0, %v947
    %v949 = vpop.f32.mrf.mxu0
    %950 = vmatprep.mubr.f32.mxu0 0.0
    %951 = vmatmul.mubr.f32.gmra.mxu0 %v751
    %v952 = vpop.f32.mrf.mxu0
    %v953 = vadd.f32 0.0, %v952
    %v954 = vpop.f32.mrf.mxu0
    %955 = vmatprep.mubr.f32.mxu0 0.0
    %956 = vmatmul.mubr.f32.gmra.mxu0 %v754
    %v957 = vpop.f32.mrf.mxu0
    %v958 = vadd.f32 0.0, %v957
    %v959 = vpop.f32.mrf.mxu0
    %960 = vmatprep.mubr.f32.mxu0 0.0
    %961 = vmatmul.mubr.f32.gmra.mxu0 %v757
    %v962 = vpop.f32.mrf.mxu0
    %v963 = vadd.f32 0.0, %v962
    %v964 = vpop.f32.mrf.mxu0
    %965 = vmatprep.mubr.f32.mxu0 0.0
    %966 = vmatmul.mubr.f32.gmra.mxu0 %v760
    %v967 = vpop.f32.mrf.mxu0
    %v968 = vadd.f32 0.0, %v967
    %v969 = vpop.f32.mrf.mxu0
    %970 = vmatprep.mubr.f32.mxu0 0.0
    %971 = vmatmul.mubr.f32.gmra.mxu0 %v763
    %v972 = vpop.f32.mrf.mxu0
    %v973 = vadd.f32 0.0, %v972
    %v974 = vpop.f32.mrf.mxu0
    %975 = vmatprep.mubr.f32.mxu0 0.0
    %976 = vmatmul.mubr.f32.gmra.mxu0 %v766
    %v977 = vpop.f32.mrf.mxu0
    %v978 = vadd.f32 0.0, %v977
    %v979 = vpop.f32.mrf.mxu0
    %980 = vmatprep.mubr.f32.mxu0 0.0
    %981 = vmatmul.mubr.f32.gmra.mxu0 %v769
    %v982 = vpop.f32.mrf.mxu0
    %v983 = vadd.f32 0.0, %v982
    %v984 = vpop.f32.mrf.mxu0
    %985 = vmatprep.mubr.f32.mxu0 0.0
    %986 = vmatmul.mubr.f32.gmra.mxu0 %v772
    %v987 = vpop.f32.mrf.mxu0
    %v988 = vadd.f32 0.0, %v987
    %v989 = vpop.f32.mrf.mxu0
    %990 = vmatprep.mubr.f32.mxu0 0.0
    %991 = vmatmul.mubr.f32.gmra.mxu0 %v775
    %v992 = vpop.f32.mrf.mxu0
    %v993 = vadd.f32 0.0, %v992
    %v994 = vpop.f32.mrf.mxu0
    %995 = vmatprep.mubr.f32.mxu0 0.0
    %996 = vmatmul.mubr.f32.gmra.mxu0 %v778
    %v997 = vpop.f32.mrf.mxu0
    %v998 = vadd.f32 0.0, %v997
    %v999 = vpop.f32.mrf.mxu0
    %1000 = vmatprep.mubr.f32.mxu0 0.0
    %1001 = vmatmul.mubr.f32.gmra.mxu0 %v781
    %v1002 = vpop.f32.mrf.mxu0
    %v1003 = vadd.f32 0.0, %v1002
    %v1004 = vpop.f32.mrf.mxu0
    %1005 = vmatprep.mubr.f32.mxu0 0.0
    %1006 = vmatmul.mubr.f32.gmra.mxu0 %v784
    %v1007 = vpop.f32.mrf.mxu0
    %v1008 = vadd.f32 0.0, %v1007
    %v1009 = vpop.f32.mrf.mxu0
    %1010 = vdwg.mxu0
    %v1011 = vmax.f32 %v853, %v858
    %v1012 = vmax.f32 %v863, %v868
    %v1013 = vmax.f32 %v873, %v878
    %v1014 = vmax.f32 %v883, %v888
    %v1015 = vmax.f32 %v893, %v898
    %v1016 = vmax.f32 %v903, %v908
    %v1017 = vmax.f32 %v913, %v918
    %v1018 = vmax.f32 %v923, %v928
    %v1019 = vmax.f32 %v933, %v938
    %v1020 = vmax.f32 %v943, %v948
    %v1021 = vmax.f32 %v953, %v958
    %v1022 = vmax.f32 %v963, %v968
    %v1023 = vmax.f32 %v973, %v978
    %v1024 = vmax.f32 %v983, %v988
    %v1025 = vmax.f32 %v993, %v998
    %v1026 = vmax.f32 %v1003, %v1008
    %v1027 = vmax.f32 %v514, %v1011
    %v1028 = vmax.f32 %v515, %v1012
    %v1029 = vmax.f32 %v516, %v1013
    %v1030 = vmax.f32 %v517, %v1014
    %v1031 = vmax.f32 %v518, %v1015
    %v1032 = vmax.f32 %v519, %v1016
    %v1033 = vmax.f32 %v520, %v1017
    %v1034 = vmax.f32 %v521, %v1018
    %v1035 = vmax.f32 %v522, %v1019
    %v1036 = vmax.f32 %v523, %v1020
    %v1037 = vmax.f32 %v524, %v1021
    %v1038 = vmax.f32 %v525, %v1022
    %v1039 = vmax.f32 %v526, %v1023
    %v1040 = vmax.f32 %v527, %v1024
    %v1041 = vmax.f32 %v528, %v1025
    %v1042 = vmax.f32 %v529, %v1026
    %v1043 = vcombine.low %v1027, %v1029
    %v1044 = vcombine.high %v1027, %v1029
    %v1046 = vunpack.c.l.s4 1983009808
    %v1047 = vunpack.c.0.s8 %v1046
    %v1048 = vlaneseq
    %v1049 = vshrl.u32 %v1048, 7
    %v1050 = vsub.s32 %v1047, %v1049
    %v1051 = vrot.slane %v1043, %v1050
    %v1053 = vunpack.c.l.s4 1983009808
    %v1054 = vunpack.c.0.s8 %v1053
    %v1055 = vlaneseq
    %v1056 = vshrl.u32 %v1055, 7
    %v1057 = vsub.s32 %v1054, %v1056
    %v1058 = vrot.slane %v1044, %v1057
    %v1059 = vcombine.low %v1028, %v1030
    %v1060 = vcombine.high %v1028, %v1030
    %v1062 = vunpack.c.l.s4 1983009808
    %v1063 = vunpack.c.0.s8 %v1062
    %v1064 = vlaneseq
    %v1065 = vshrl.u32 %v1064, 7
    %v1066 = vsub.s32 %v1063, %v1065
    %v1067 = vrot.slane %v1059, %v1066
    %v1069 = vunpack.c.l.s4 1983009808
    %v1070 = vunpack.c.0.s8 %v1069
    %v1071 = vlaneseq
    %v1072 = vshrl.u32 %v1071, 7
    %v1073 = vsub.s32 %v1070, %v1072
    %v1074 = vrot.slane %v1060, %v1073
    %v1075 = vcombine.low %v1031, %v1033
    %v1076 = vcombine.high %v1031, %v1033
    %v1078 = vunpack.c.l.s4 1983009808
    %v1079 = vunpack.c.0.s8 %v1078
    %v1080 = vlaneseq
    %v1081 = vshrl.u32 %v1080, 7
    %v1082 = vsub.s32 %v1079, %v1081
    %v1083 = vrot.slane %v1075, %v1082
    %v1085 = vunpack.c.l.s4 1983009808
    %v1086 = vunpack.c.0.s8 %v1085
    %v1087 = vlaneseq
    %v1088 = vshrl.u32 %v1087, 7
    %v1089 = vsub.s32 %v1086, %v1088
    %v1090 = vrot.slane %v1076, %v1089
    %v1091 = vcombine.low %v1032, %v1034
    %v1092 = vcombine.high %v1032, %v1034
    %v1094 = vunpack.c.l.s4 1983009808
    %v1095 = vunpack.c.0.s8 %v1094
    %v1096 = vlaneseq
    %v1097 = vshrl.u32 %v1096, 7
    %v1098 = vsub.s32 %v1095, %v1097
    %v1099 = vrot.slane %v1091, %v1098
    %v1101 = vunpack.c.l.s4 1983009808
    %v1102 = vunpack.c.0.s8 %v1101
    %v1103 = vlaneseq
    %v1104 = vshrl.u32 %v1103, 7
    %v1105 = vsub.s32 %v1102, %v1104
    %v1106 = vrot.slane %v1092, %v1105
    %v1107 = vcombine.low %v1051, %v1067
    %v1108 = vcombine.high %v1051, %v1067
    %v1110 = vunpack.c.l.s4 1934713408
    %v1111 = vunpack.c.0.s8 %v1110
    %v1112 = vlaneseq
    %v1113 = vshrl.u32 %v1112, 7
    %v1114 = vsub.s32 %v1111, %v1113
    %v1115 = vrot.slane %v1107, %v1114
    %v1117 = vunpack.c.l.s4 1934713408
    %v1118 = vunpack.c.0.s8 %v1117
    %v1119 = vlaneseq
    %v1120 = vshrl.u32 %v1119, 7
    %v1121 = vsub.s32 %v1118, %v1120
    %v1122 = vrot.slane %v1108, %v1121
    %v1123 = vcombine.low %v1058, %v1074
    %v1124 = vcombine.high %v1058, %v1074
    %v1126 = vunpack.c.l.s4 1934713408
    %v1127 = vunpack.c.0.s8 %v1126
    %v1128 = vlaneseq
    %v1129 = vshrl.u32 %v1128, 7
    %v1130 = vsub.s32 %v1127, %v1129
    %v1131 = vrot.slane %v1123, %v1130
    %v1133 = vunpack.c.l.s4 1934713408
    %v1134 = vunpack.c.0.s8 %v1133
    %v1135 = vlaneseq
    %v1136 = vshrl.u32 %v1135, 7
    %v1137 = vsub.s32 %v1134, %v1136
    %v1138 = vrot.slane %v1124, %v1137
    %v1139 = vcombine.low %v1083, %v1099
    %v1140 = vcombine.high %v1083, %v1099
    %v1142 = vunpack.c.l.s4 1934713408
    %v1143 = vunpack.c.0.s8 %v1142
    %v1144 = vlaneseq
    %v1145 = vshrl.u32 %v1144, 7
    %v1146 = vsub.s32 %v1143, %v1145
    %v1147 = vrot.slane %v1139, %v1146
    %v1149 = vunpack.c.l.s4 1934713408
    %v1150 = vunpack.c.0.s8 %v1149
    %v1151 = vlaneseq
    %v1152 = vshrl.u32 %v1151, 7
    %v1153 = vsub.s32 %v1150, %v1152
    %v1154 = vrot.slane %v1140, %v1153
    %v1155 = vcombine.low %v1090, %v1106
    %v1156 = vcombine.high %v1090, %v1106
    %v1158 = vunpack.c.l.s4 1934713408
    %v1159 = vunpack.c.0.s8 %v1158
    %v1160 = vlaneseq
    %v1161 = vshrl.u32 %v1160, 7
    %v1162 = vsub.s32 %v1159, %v1161
    %v1163 = vrot.slane %v1155, %v1162
    %v1165 = vunpack.c.l.s4 1934713408
    %v1166 = vunpack.c.0.s8 %v1165
    %v1167 = vlaneseq
    %v1168 = vshrl.u32 %v1167, 7
    %v1169 = vsub.s32 %v1166, %v1168
    %v1170 = vrot.slane %v1156, %v1169
    %v1171 = vcombine.low %v1115, %v1147
    %v1172 = vcombine.high %v1115, %v1147
    %v1173 = vcombine.low %v1122, %v1154
    %v1174 = vcombine.high %v1122, %v1154
    %v1175 = vcombine.low %v1131, %v1163
    %v1176 = vcombine.high %v1131, %v1163
    %v1177 = vcombine.low %v1138, %v1170
    %v1178 = vcombine.high %v1138, %v1170
    %v1179 = vcombine.low %v1035, %v1037
    %v1180 = vcombine.high %v1035, %v1037
    %v1182 = vunpack.c.l.s4 1983009808
    %v1183 = vunpack.c.0.s8 %v1182
    %v1184 = vlaneseq
    %v1185 = vshrl.u32 %v1184, 7
    %v1186 = vsub.s32 %v1183, %v1185
    %v1187 = vrot.slane %v1179, %v1186
    %v1189 = vunpack.c.l.s4 1983009808
    %v1190 = vunpack.c.0.s8 %v1189
    %v1191 = vlaneseq
    %v1192 = vshrl.u32 %v1191, 7
    %v1193 = vsub.s32 %v1190, %v1192
    %v1194 = vrot.slane %v1180, %v1193
    %v1195 = vcombine.low %v1036, %v1038
    %v1196 = vcombine.high %v1036, %v1038
    %v1198 = vunpack.c.l.s4 1983009808
    %v1199 = vunpack.c.0.s8 %v1198
    %v1200 = vlaneseq
    %v1201 = vshrl.u32 %v1200, 7
    %v1202 = vsub.s32 %v1199, %v1201
    %v1203 = vrot.slane %v1195, %v1202
    %v1205 = vunpack.c.l.s4 1983009808
    %v1206 = vunpack.c.0.s8 %v1205
    %v1207 = vlaneseq
    %v1208 = vshrl.u32 %v1207, 7
    %v1209 = vsub.s32 %v1206, %v1208
    %v1210 = vrot.slane %v1196, %v1209
    %v1211 = vcombine.low %v1039, %v1041
    %v1212 = vcombine.high %v1039, %v1041
    %v1214 = vunpack.c.l.s4 1983009808
    %v1215 = vunpack.c.0.s8 %v1214
    %v1216 = vlaneseq
    %v1217 = vshrl.u32 %v1216, 7
    %v1218 = vsub.s32 %v1215, %v1217
    %v1219 = vrot.slane %v1211, %v1218
    %v1221 = vunpack.c.l.s4 1983009808
    %v1222 = vunpack.c.0.s8 %v1221
    %v1223 = vlaneseq
    %v1224 = vshrl.u32 %v1223, 7
    %v1225 = vsub.s32 %v1222, %v1224
    %v1226 = vrot.slane %v1212, %v1225
    %v1227 = vcombine.low %v1040, %v1042
    %v1228 = vcombine.high %v1040, %v1042
    %v1230 = vunpack.c.l.s4 1983009808
    %v1231 = vunpack.c.0.s8 %v1230
    %v1232 = vlaneseq
    %v1233 = vshrl.u32 %v1232, 7
    %v1234 = vsub.s32 %v1231, %v1233
    %v1235 = vrot.slane %v1227, %v1234
    %v1237 = vunpack.c.l.s4 1983009808
    %v1238 = vunpack.c.0.s8 %v1237
    %v1239 = vlaneseq
    %v1240 = vshrl.u32 %v1239, 7
    %v1241 = vsub.s32 %v1238, %v1240
    %v1242 = vrot.slane %v1228, %v1241
    %v1243 = vcombine.low %v1187, %v1203
    %v1244 = vcombine.high %v1187, %v1203
    %v1246 = vunpack.c.l.s4 1934713408
    %v1247 = vunpack.c.0.s8 %v1246
    %v1248 = vlaneseq
    %v1249 = vshrl.u32 %v1248, 7
    %v1250 = vsub.s32 %v1247, %v1249
    %v1251 = vrot.slane %v1243, %v1250
    %v1253 = vunpack.c.l.s4 1934713408
    %v1254 = vunpack.c.0.s8 %v1253
    %v1255 = vlaneseq
    %v1256 = vshrl.u32 %v1255, 7
    %v1257 = vsub.s32 %v1254, %v1256
    %v1258 = vrot.slane %v1244, %v1257
    %v1259 = vcombine.low %v1194, %v1210
    %v1260 = vcombine.high %v1194, %v1210
    %v1262 = vunpack.c.l.s4 1934713408
    %v1263 = vunpack.c.0.s8 %v1262
    %v1264 = vlaneseq
    %v1265 = vshrl.u32 %v1264, 7
    %v1266 = vsub.s32 %v1263, %v1265
    %v1267 = vrot.slane %v1259, %v1266
    %v1269 = vunpack.c.l.s4 1934713408
    %v1270 = vunpack.c.0.s8 %v1269
    %v1271 = vlaneseq
    %v1272 = vshrl.u32 %v1271, 7
    %v1273 = vsub.s32 %v1270, %v1272
    %v1274 = vrot.slane %v1260, %v1273
    %v1275 = vcombine.low %v1219, %v1235
    %v1276 = vcombine.high %v1219, %v1235
    %v1278 = vunpack.c.l.s4 1934713408
    %v1279 = vunpack.c.0.s8 %v1278
    %v1280 = vlaneseq
    %v1281 = vshrl.u32 %v1280, 7
    %v1282 = vsub.s32 %v1279, %v1281
    %v1283 = vrot.slane %v1275, %v1282
    %v1285 = vunpack.c.l.s4 1934713408
    %v1286 = vunpack.c.0.s8 %v1285
    %v1287 = vlaneseq
    %v1288 = vshrl.u32 %v1287, 7
    %v1289 = vsub.s32 %v1286, %v1288
    %v1290 = vrot.slane %v1276, %v1289
    %v1291 = vcombine.low %v1226, %v1242
    %v1292 = vcombine.high %v1226, %v1242
    %v1294 = vunpack.c.l.s4 1934713408
    %v1295 = vunpack.c.0.s8 %v1294
    %v1296 = vlaneseq
    %v1297 = vshrl.u32 %v1296, 7
    %v1298 = vsub.s32 %v1295, %v1297
    %v1299 = vrot.slane %v1291, %v1298
    %v1301 = vunpack.c.l.s4 1934713408
    %v1302 = vunpack.c.0.s8 %v1301
    %v1303 = vlaneseq
    %v1304 = vshrl.u32 %v1303, 7
    %v1305 = vsub.s32 %v1302, %v1304
    %v1306 = vrot.slane %v1292, %v1305
    %v1307 = vcombine.low %v1251, %v1283
    %v1308 = vcombine.high %v1251, %v1283
    %v1309 = vcombine.low %v1258, %v1290
    %v1310 = vcombine.high %v1258, %v1290
    %v1311 = vcombine.low %v1267, %v1299
    %v1312 = vcombine.high %v1267, %v1299
    %v1313 = vcombine.low %v1274, %v1306
    %v1314 = vcombine.high %v1274, %v1306
    %1317 = vrot.lane.b32.xlu0 %v1172, 8
    %v1318 = vpop.permute.xlu0 %1317
    %1319 = vrot.lane.b32.xlu0 %v1308, 8
    %v1320 = vpop.permute.xlu0 %1319
    %1325 = vrot.lane.b32.xlu0 %v1173, 16
    %v1326 = vpop.permute.xlu0 %1325
    %1327 = vrot.lane.b32.xlu0 %v1309, 16
    %v1328 = vpop.permute.xlu0 %1327
    %1333 = vrot.lane.b32.xlu0 %v1174, 24
    %v1334 = vpop.permute.xlu0 %1333
    %1335 = vrot.lane.b32.xlu0 %v1310, 24
    %v1336 = vpop.permute.xlu0 %1335
    %1341 = vrot.lane.b32.xlu0 %v1175, 32
    %v1342 = vpop.permute.xlu0 %1341
    %1343 = vrot.lane.b32.xlu0 %v1311, 32
    %v1344 = vpop.permute.xlu0 %1343
    %1349 = vrot.lane.b32.xlu0 %v1176, 40
    %v1350 = vpop.permute.xlu0 %1349
    %1351 = vrot.lane.b32.xlu0 %v1312, 40
    %v1352 = vpop.permute.xlu0 %1351
    %1357 = vrot.lane.b32.xlu0 %v1177, 48
    %v1358 = vpop.permute.xlu0 %1357
    %1359 = vrot.lane.b32.xlu0 %v1313, 48
    %v1360 = vpop.permute.xlu0 %1359
    %1365 = vrot.lane.b32.xlu0 %v1178, 56
    %v1366 = vpop.permute.xlu0 %1365
    %1367 = vrot.lane.b32.xlu0 %v1314, 56
    %v1368 = vpop.permute.xlu0 %1367
    %v1371 = vsel %vm192, %v1171, %v1318
    %v1372 = vsel %vm192, %v1307, %v1320
    %vm1373 = vcmask 130048
    %v1374 = vsel %vm1373, %v1371, %v1326
    %v1375 = vsel %vm1373, %v1372, %v1328
    %vm1376 = vcmask 195584
    %v1377 = vsel %vm1376, %v1374, %v1334
    %v1378 = vsel %vm1376, %v1375, %v1336
    %vm1379 = vcmask 261120
    %v1380 = vsel %vm1379, %v1377, %v1342
    %v1381 = vsel %vm1379, %v1378, %v1344
    %vm1382 = vcmask 326656
    %v1383 = vsel %vm1382, %v1380, %v1350
    %v1384 = vsel %vm1382, %v1381, %v1352
    %vm1385 = vcmask 392192
    %v1386 = vsel %vm1385, %v1383, %v1358
    %v1387 = vsel %vm1385, %v1384, %v1360
    %vm1388 = vcmask 457728
    %v1389 = vsel %vm1388, %v1386, %v1366
    %v1390 = vsel %vm1388, %v1387, %v1368
    %vm1391 = vcmask 523264
    %1392 = vst.msk [vmem:[#allocation2] sm:$0xff] %vm1391, %v1389
    %1393 = vst.msk [vmem:[#allocation2 + $0x8] sm:$0xff] %vm1391, %v1390
    // Predicated region
    $region18: #{tpu_custom_call.1} parent=1 // pred_check
      _
    $region19: #{tpu_custom_call.1} parent=1 // pred_check_branch
      %1395 = sbr.rel (0) target = $region21
    $region20: #{tpu_custom_call.1} parent=1 // pred_region
      %s1397 = ssub.s32 256, 256
      %1398 = vsyncadd [#allocation3], %s1397
      %s1399 = sshll.u32 [#allocation2], 4
      %s1400 = int_to_ptr.vmem [resolvable:$true] %s1399
      %1405 = dma.vmem_to_hbm [thread:$0]  %s1400, 256, %s4, [#allocation3], 128, 128, 8
    $region21: #{tpu_custom_call.1} parent=1 // pred_fallthru
      _
    // Predicated region
    $region22: #{tpu_custom_call.1} parent=1 // pred_check
      _
    $region23: #{tpu_custom_call.1} parent=1 // pred_check_branch
      %1407 = sbr.rel (0) target = $region25
    $region24: #{tpu_custom_call.1} parent=1 // pred_region
      %1408 = dma.done [#allocation3], 256
    $region25: #{tpu_custom_call.1} parent=1 // pred_fallthru
      _
    %1409 = vsyncpa [#allocation3], 1

</llo_original>
